<compile_context>
chip_gen: v7x
topology: tpu7x:2x2x1
jax: 0.10.0
libtpu: 0.0.40
codegen_flags: <defaults>
</compile_context>

<pallas_src>
import functools

import jax
import jax.numpy as jnp
from jax import lax
from jax.experimental import pallas as pl
from jax.experimental.pallas import tpu as pltpu


def _round_up(x, m):
    return ((x + m - 1) // m) * m


def _vmem_capacity_bytes():
    try:
        return int(pltpu.get_tpu_info().vmem_capacity_bytes)
    except Exception:
        return 64 * 1024 * 1024      # conservative fallback (v7x per-TC VMEM)


# --------------------------------------------------------------------------- #
# Stage 1: stream the memory bank, accumulate per-cluster feature sums.
# --------------------------------------------------------------------------- #
def _hm_stream_kernel(lab_ref, f_ref, csum_ref, *, tiles_per_split):
    s = pl.program_id(0)          # bank split ("parallel" -> one per TC on v7x)
    t = pl.program_id(1)          # tile within the split ("arbitrary")

    @pl.when(t == 0)
    def _():
        csum_ref[...] = jnp.zeros_like(csum_ref)

    # Cluster ids for this tile, sliced from the resident label block.
    g = s * tiles_per_split + t                                  # global tile idx
    lab = lab_ref[pl.ds(g, 1), :]                                # (1, tn) int32

    # Lane-dense one-hot of the tile's cluster ids: (c_pad, tn).
    c_pad = csum_ref.shape[0]
    iota_c = lax.broadcasted_iota(jnp.int32, (c_pad, lab.shape[1]), 0)
    onehot = (iota_c == lab).astype(f_ref.dtype)                 # bf16, 0/1 exact

    # csum[c, :] += sum_j onehot[c, j] * f_tile[j, :]   (single MXU pass)
    csum_ref[...] += jnp.dot(onehot, f_ref[...],
                             preferred_element_type=jnp.float32)


# --------------------------------------------------------------------------- #
# Stage 2: combine splits, masked softmax (module-faithful), mean NLL.
# --------------------------------------------------------------------------- #
def _hm_epilogue_kernel(csum_ref, cnt_ref, x_ref, tgt_ref, out_ref, *,
                        inv_temp, batch_size):
    csum = jnp.sum(csum_ref[...], axis=0)                        # (c_pad, D)
    cnt = cnt_ref[...]                                           # (1, c_pad)
    mask = cnt > 0.0
    maskf = mask.astype(jnp.float32)
    denom = jnp.where(mask, cnt, 1.0)                            # empty clusters -> /1

    # sim[b, c] = inv_temp * (inputs[b] . csum[c]) / cnt[c]
    sim = lax.dot_general(x_ref[...], csum,
                          dimension_numbers=(((1,), (1,)), ((), ())),
                          preferred_element_type=jnp.float32)    # (B, c_pad)
    sim = sim * inv_temp / denom

    # Module-faithful masked softmax: exp of the *unshifted* sim, eps on the sum.
    exps = jnp.exp(sim) * maskf
    sums = jnp.sum(exps, axis=1, keepdims=True) + 1e-6
    logp = jnp.log(exps / sums + 1e-6)

    # nll_loss(log(masked_sim + 1e-6), targets), reduction='mean'
    loss = -jnp.sum(tgt_ref[...] * logp) * (1.0 / batch_size)
    out_ref[...] = jnp.full((1, 1), loss, dtype=jnp.float32)


# --------------------------------------------------------------------------- #
# One-off packing of the persistent module buffers (bank / labels / counts).
# --------------------------------------------------------------------------- #
def prepare_hm_state(features, labels, num_clusters, *, n_splits=2, tn=None):
    """Packs the long-lived HybridMemory buffers once (not per forward call)."""
    N, D = features.shape
    if tn is None:
        # Target a few-MiB bf16 streamed tile, capped by what's needed to cover N.
        target_rows = max(256, min(8192, (4 * 1024 * 1024) // max(2 * D, 1)))
        need_rows = (N + n_splits - 1) // n_splits
        tn = _round_up(max(1, min(target_rows, need_rows)), 128)
    assert tn % 128 == 0, "streamed tile rows must be a multiple of 128"

    chunk = n_splits * tn
    n_pad = _round_up(N, chunk)

    # Padded bank rows are all-zero so they add nothing to any cluster sum,
    # whatever their (zero-padded) label is.  Bank stored/streamed in bf16.
    f_packed = jnp.pad(features, ((0, n_pad - N), (0, 0))).astype(jnp.bfloat16)
    lab_packed = jnp.pad(labels.astype(jnp.int32),
                         (0, n_pad - N)).reshape(n_pad // tn, tn)

    # Per-cluster counts from the *unpadded* labels; C padded only to 16.
    c_pad = _round_up(max(int(num_clusters), 1), 16)
    cnt = jnp.zeros((c_pad,), jnp.float32).at[labels].add(1.0).reshape(1, c_pad)
    return f_packed, lab_packed, cnt


# --------------------------------------------------------------------------- #
# Forward (loss only, as the module's forward returns the NLL loss).
# --------------------------------------------------------------------------- #
def _hm_forward(inputs, indexes, f_packed, lab_packed, cnt, *, temp, n_splits):
    B, D = inputs.shape
    n_tiles, tn = lab_packed.shape
    assert n_tiles % n_splits == 0
    tiles_per_split = n_tiles // n_splits
    c_pad = cnt.shape[1]

    # VMEM budget: double-buffered streamed tile + resident labels + resident
    # csum output block (lane-padded), with headroom, clamped to 75% of the
    # generation's physical VMEM.
    d_lane = _round_up(D, 128)
    est = (2 * tn * d_lane * 2                        # bf16 bank tile (x2 buffers)
           + 2 * _round_up(n_tiles, 8) * tn * 4       # resident labels
           + 2 * _round_up(c_pad, 8) * d_lane * 4     # resident csum block
           + 2 * 8 * 128 * 4)
    cap = _vmem_capacity_bytes()
    vmem_limit = int(min(max(int(1.5 * est), 16 * 1024 * 1024), int(0.75 * cap)))

    csum_parts = pl.pallas_call(
        functools.partial(_hm_stream_kernel, tiles_per_split=tiles_per_split),
        out_shape=jax.ShapeDtypeStruct((n_splits, c_pad, D), jnp.float32),
        grid_spec=pltpu.PrefetchScalarGridSpec(
            num_scalar_prefetch=0,
            grid=(n_splits, tiles_per_split),
            in_specs=[
                pl.BlockSpec((n_tiles, tn), lambda s, t: (0, 0)),          # labels (resident)
                pl.BlockSpec((tn, D),
                             lambda s, t: (s * tiles_per_split + t, 0)),   # bank tile (streamed)
            ],
            out_specs=pl.BlockSpec((None, c_pad, D), lambda s, t: (s, 0, 0)),
        ),
        compiler_params=pltpu.CompilerParams(
            dimension_semantics=("parallel", "arbitrary"),
            vmem_limit_bytes=vmem_limit),
    )(lab_packed, f_packed)

    # Tiny glue: targets and their one-hot (B x c_pad).
    targets = lab_packed.reshape(-1)[indexes]
    tgt_onehot = jax.nn.one_hot(targets, c_pad, dtype=jnp.float32)

    loss = pl.pallas_call(
        functools.partial(_hm_epilogue_kernel,
                          inv_temp=1.0 / float(temp), batch_size=float(B)),
        out_shape=jax.ShapeDtypeStruct((1, 1), jnp.float32),
        grid_spec=pltpu.PrefetchScalarGridSpec(
            num_scalar_prefetch=0,
            grid=(1,),
            in_specs=[
                pl.BlockSpec((n_splits, c_pad, D), lambda i: (0, 0, 0)),
                pl.BlockSpec((1, c_pad), lambda i: (0, 0)),
                pl.BlockSpec((B, D), lambda i: (0, 0)),
                pl.BlockSpec((B, c_pad), lambda i: (0, 0)),
            ],
            out_specs=pl.BlockSpec((1, 1), lambda i: (0, 0))),
    )(csum_parts, cnt, inputs.astype(jnp.float32), tgt_onehot)
    return loss[0, 0]


hybrid_memory_loss = jax.jit(_hm_forward, static_argnames=("temp", "n_splits"))


# --------------------------------------------------------------------------- #
# Pure-JAX replica of the PyTorch forward, for verification.
# --------------------------------------------------------------------------- #
def _reference_forward(inputs, features, labels, indexes, num_clusters, temp=0.05):
    logits = (inputs @ features.T) / temp                              # (B, N)
    onehot = jax.nn.one_hot(labels, num_clusters, dtype=jnp.float32)   # (N, C)
    sim = onehot.T @ logits.T                                          # (C, B)
    nums = onehot.sum(axis=0)[:, None]                                 # (C, 1)
    mask = (nums > 0).astype(jnp.float32)
    sim = sim / (mask * nums + (1.0 - mask))
    maskT = jnp.broadcast_to(mask, sim.shape).T                        # (B, C)
    exps = jnp.exp(sim.T) * maskT
    masked_sim = exps / (exps.sum(axis=1, keepdims=True) + 1e-6)
    logp = jnp.log(masked_sim + 1e-6)
    targets = labels[indexes]
    return -jnp.mean(logp[jnp.arange(inputs.shape[0]), targets])


if __name__ == "__main__":
    # Small synthetic config consistent with the module:
    #   num_features=32, num_samples=200, batch B=8, 5 clusters.
    B, D, N, C = 8, 32, 200, 5
    key = jax.random.PRNGKey(0)
    k_in, k_feat, k_lab, k_idx = jax.random.split(key, 4)

    inputs = jax.random.normal(k_in, (B, D), dtype=jnp.float32)
    inputs = inputs / jnp.linalg.norm(inputs, axis=1, keepdims=True)

    # Deterministic synthetic memory bank (the module registers a zero buffer
    # that gets filled at runtime; here we fill it deterministically in-script).
    features = jax.random.normal(k_feat, (N, D), dtype=jnp.float32)
    features = features / jnp.linalg.norm(features, axis=1, keepdims=True)

    labels = jax.random.randint(k_lab, (N,), 0, C, dtype=jnp.int32)   # self.labels[-1]
    indexes = jax.random.randint(k_idx, (B,), 0, N, dtype=jnp.int32)

    # One-off packing of the persistent buffers (module state), NOT per call.
    f_packed, lab_packed, cnt = prepare_hm_state(features, labels, C, n_splits=2)

    loss = hybrid_memory_loss(inputs, indexes, f_packed, lab_packed, cnt,
                              temp=0.05, n_splits=2)
    loss = jax.block_until_ready(loss)

    # Reference uses the same bf16-rounded bank the kernel streams, so the only
    # remaining differences are f32 summation order.
    f_bank = features.astype(jnp.bfloat16).astype(jnp.float32)
    ref = jax.block_until_ready(
        _reference_forward(inputs, f_bank, labels, indexes, C, temp=0.05))

    assert jnp.isfinite(loss), "non-finite loss"
    assert abs(float(loss) - float(ref)) < 1e-3, (float(loss), float(ref))

    print("KERNEL_OK")
</pallas_src>

<mosaic_0001>
module attributes {stable_mosaic.version = 11 : i64} {
  func.func @_hm_stream_kernel(%arg0: i32, %arg1: i32, %arg2: memref<2x128xi32, #tpu.memory_space<vmem>>, %arg3: memref<128x32xbf16, #tpu.memory_space<vmem>>, %arg4: memref<1x16x32xf32, #tpu.memory_space<vmem>>) attributes {dimension_semantics = [#tpu.dimension_semantics<parallel>, #tpu.dimension_semantics<arbitrary>], iteration_bounds = array<i64: 2, 1>, scalar_prefetch = 0 : i64, scratch_operands = 0 : i64, tpu.core_type = #tpu.core_type<tc>, window_params = [{pipeline_mode = #tpu.pipeline_mode<synchronous>, transform_indices = @transform_0, window_bounds = array<i64: 2, 128>}, {transform_indices = @transform_1, window_bounds = array<i64: 128, 32>}, {transform_indices = @transform_2, window_bounds = array<i64: 1, 16, 32>}]} {
    %c0_i32 = arith.constant 0 : i32
    %0 = arith.cmpi eq, %arg1, %c0_i32 : i32
    %1 = arith.extui %0 : i1 to i32
    %c0_i32_0 = arith.constant 0 : i32
    %2 = arith.cmpi ne, %1, %c0_i32_0 : i32
    scf.if %2 {
      %cst_9 = arith.constant 0.000000e+00 : f32
      %21 = vector.broadcast %cst_9 : f32 to vector<16x32xf32>
      %c0_10 = arith.constant 0 : index
      %c0_11 = arith.constant 0 : index
      %c0_12 = arith.constant 0 : index
      %22 = vector.load %arg4[%c0_10, %c0_11, %c0_12] : memref<1x16x32xf32, #tpu.memory_space<vmem>>, vector<1x16x32xf32>
      %23 = vector.shape_cast %22 : vector<1x16x32xf32> to vector<16x32xf32>
      %24 = vector.shape_cast %21 : vector<16x32xf32> to vector<1x16x32xf32>
      tpu.vector_store %arg4[%c0_10, %c0_11, %c0_12], %24 {strides = array<i32>} : memref<1x16x32xf32, #tpu.memory_space<vmem>>, vector<1x16x32xf32>,
    } else {
    }
    %c1_i32 = arith.constant 1 : i32
    %3 = arith.muli %arg0, %c1_i32 : i32
    %4 = arith.addi %3, %arg1 : i32
    %5 = arith.index_cast %4 : i32 to index
    %c0 = arith.constant 0 : index
    %6 = vector.load %arg2[%5, %c0] : memref<2x128xi32, #tpu.memory_space<vmem>>, vector<1x128xi32>
    %7 = tpu.iota {dimensions = array<i32: 0>} : vector<16x128xi32>
    %8 = vector.broadcast %6 : vector<1x128xi32> to vector<16x128xi32>
    %9 = arith.cmpi eq, %7, %8 : vector<16x128xi32>
    %10 = arith.extui %9 : vector<16x128xi1> to vector<16x128xi32>
    %11 = arith.sitofp %10 : vector<16x128xi32> to vector<16x128xf32>
    %12 = arith.truncf %11 : vector<16x128xf32> to vector<16x128xbf16>
    %c0_1 = arith.constant 0 : index
    %c0_2 = arith.constant 0 : index
    %c0_3 = arith.constant 0 : index
    %13 = vector.load %arg4[%c0_1, %c0_2, %c0_3] : memref<1x16x32xf32, #tpu.memory_space<vmem>>, vector<1x16x32xf32>
    %14 = vector.shape_cast %13 : vector<1x16x32xf32> to vector<16x32xf32>
    %c0_4 = arith.constant 0 : index
    %c0_5 = arith.constant 0 : index
    %15 = vector.load %arg3[%c0_4, %c0_5] : memref<128x32xbf16, #tpu.memory_space<vmem>>, vector<128x32xbf16>
    %cst = arith.constant dense<0.000000e+00> : vector<16x32xf32>
    %16 = tpu.matmul %12, %15, %cst {dimension_numbers = #tpu.dot_dimension_numbers<[1], [0], [0], [1], [0, 0, 1, 1], [], []>} : vector<16x128xbf16>, vector<128x32xbf16>, vector<16x32xf32> -> vector<16x32xf32>
    %17 = arith.addf %14, %16 : vector<16x32xf32>
    %c0_6 = arith.constant 0 : index
    %c0_7 = arith.constant 0 : index
    %c0_8 = arith.constant 0 : index
    %18 = vector.load %arg4[%c0_6, %c0_7, %c0_8] : memref<1x16x32xf32, #tpu.memory_space<vmem>>, vector<1x16x32xf32>
    %19 = vector.shape_cast %18 : vector<1x16x32xf32> to vector<16x32xf32>
    %20 = vector.shape_cast %17 : vector<16x32xf32> to vector<1x16x32xf32>
    tpu.vector_store %arg4[%c0_6, %c0_7, %c0_8], %20 {strides = array<i32>} : memref<1x16x32xf32, #tpu.memory_space<vmem>>, vector<1x16x32xf32>,
    return
  }
  func.func @transform_0(%arg0: i32, %arg1: i32) -> (i32, i32) {
    %c0_i32 = arith.constant 0 : i32
    %c0_i32_0 = arith.constant 0 : i32
    %c0_i32_1 = arith.constant 0 : i32
    return %c0_i32, %c0_i32_0 : i32, i32
  }
  func.func @transform_1(%arg0: i32, %arg1: i32) -> (i32, i32) {
    %c1_i32 = arith.constant 1 : i32
    %0 = arith.muli %arg0, %c1_i32 : i32
    %1 = arith.addi %0, %arg1 : i32
    %c0_i32 = arith.constant 0 : i32
    %c0_i32_0 = arith.constant 0 : i32
    return %1, %c0_i32 : i32, i32
  }
  func.func @transform_2(%arg0: i32, %arg1: i32) -> (i32, i32, i32) {
    %c0_i32 = arith.constant 0 : i32
    %c0_i32_0 = arith.constant 0 : i32
    %c0_i32_1 = arith.constant 0 : i32
    return %arg0, %c0_i32, %c0_i32_0 : i32, i32, i32
  }
}

module attributes {stable_mosaic.version = 11 : i64} {
  func.func @_hm_epilogue_kernel(%arg0: i32, %arg1: memref<2x16x32xf32, #tpu.memory_space<vmem>>, %arg2: memref<1x16xf32, #tpu.memory_space<vmem>>, %arg3: memref<8x32xf32, #tpu.memory_space<vmem>>, %arg4: memref<8x16xf32, #tpu.memory_space<vmem>>, %arg5: memref<1x1xf32, #tpu.memory_space<vmem>>) attributes {dimension_semantics = [#tpu.dimension_semantics<arbitrary>], iteration_bounds = array<i64: 1>, scalar_prefetch = 0 : i64, scratch_operands = 0 : i64, tpu.core_type = #tpu.core_type<tc>, window_params = [{pipeline_mode = #tpu.pipeline_mode<synchronous>, transform_indices = @transform_0, window_bounds = array<i64: 2, 16, 32>}, {pipeline_mode = #tpu.pipeline_mode<synchronous>, transform_indices = @transform_1, window_bounds = array<i64: 1, 16>}, {pipeline_mode = #tpu.pipeline_mode<synchronous>, transform_indices = @transform_2, window_bounds = array<i64: 8, 32>}, {pipeline_mode = #tpu.pipeline_mode<synchronous>, transform_indices = @transform_3, window_bounds = array<i64: 8, 16>}, {pipeline_mode = #tpu.pipeline_mode<synchronous>, transform_indices = @transform_4, window_bounds = array<i64: 1, 1>}]} {
    %c0 = arith.constant 0 : index
    %c0_0 = arith.constant 0 : index
    %c0_1 = arith.constant 0 : index
    %0 = vector.load %arg1[%c0, %c0_0, %c0_1] : memref<2x16x32xf32, #tpu.memory_space<vmem>>, vector<2x16x32xf32>
    %cst = arith.constant dense<0.000000e+00> : vector<16x32xf32>
    %1 = vector.multi_reduction <add>, %0, %cst [0] : vector<2x16x32xf32> to vector<16x32xf32>
    %c0_2 = arith.constant 0 : index
    %c0_3 = arith.constant 0 : index
    %2 = vector.load %arg2[%c0_2, %c0_3] : memref<1x16xf32, #tpu.memory_space<vmem>>, vector<1x16xf32>
    %cst_4 = arith.constant 0.000000e+00 : f32
    %3 = vector.broadcast %cst_4 : f32 to vector<1x16xf32>
    %4 = arith.cmpf ogt, %2, %3 : vector<1x16xf32>
    %5 = arith.extui %4 : vector<1x16xi1> to vector<1x16xi32>
    %6 = arith.sitofp %5 : vector<1x16xi32> to vector<1x16xf32>
    %cst_5 = arith.constant 1.000000e+00 : f32
    %7 = vector.broadcast %cst_5 : f32 to vector<1x16xf32>
    %8 = arith.select %4, %2, %7 : vector<1x16xi1>, vector<1x16xf32>
    %c0_6 = arith.constant 0 : index
    %c0_7 = arith.constant 0 : index
    %9 = vector.load %arg3[%c0_6, %c0_7] : memref<8x32xf32, #tpu.memory_space<vmem>>, vector<8x32xf32>
    %cst_8 = arith.constant dense<0.000000e+00> : vector<8x16xf32>
    %10 = tpu.matmul %9, %1, %cst_8 {dimension_numbers = #tpu.dot_dimension_numbers<[1], [1], [0], [0], [0, 0, 1, 0], [], []>} : vector<8x32xf32>, vector<16x32xf32>, vector<8x16xf32> -> vector<8x16xf32>
    %cst_9 = arith.constant 2.000000e+01 : f32
    %11 = vector.broadcast %cst_9 : f32 to vector<8x16xf32>
    %12 = arith.mulf %10, %11 : vector<8x16xf32>
    %13 = vector.broadcast %8 : vector<1x16xf32> to vector<8x16xf32>
    %14 = arith.divf %12, %13 : vector<8x16xf32>
    %15 = math.exp %14 : vector<8x16xf32>
    %16 = vector.broadcast %6 : vector<1x16xf32> to vector<8x16xf32>
    %17 = arith.mulf %15, %16 : vector<8x16xf32>
    %cst_10 = arith.constant dense<0.000000e+00> : vector<8xf32>
    %18 = vector.multi_reduction <add>, %17, %cst_10 [1] : vector<8x16xf32> to vector<8xf32>
    %19 = vector.shape_cast %18 : vector<8xf32> to vector<8x1xf32>
    %cst_11 = arith.constant 9.99999997E-7 : f32
    %20 = vector.broadcast %cst_11 : f32 to vector<8x1xf32>
    %21 = arith.addf %19, %20 : vector<8x1xf32>
    %22 = vector.broadcast %21 : vector<8x1xf32> to vector<8x16xf32>
    %23 = arith.divf %17, %22 : vector<8x16xf32>
    %cst_12 = arith.constant 9.99999997E-7 : f32
    %24 = vector.broadcast %cst_12 : f32 to vector<8x16xf32>
    %25 = arith.addf %23, %24 : vector<8x16xf32>
    %26 = math.log %25 : vector<8x16xf32>
    %c0_13 = arith.constant 0 : index
    %c0_14 = arith.constant 0 : index
    %27 = vector.load %arg4[%c0_13, %c0_14] : memref<8x16xf32, #tpu.memory_space<vmem>>, vector<8x16xf32>
    %28 = arith.mulf %27, %26 : vector<8x16xf32>
    %29 = vector.shape_cast %28 : vector<8x16xf32> to vector<1x8x16xf32>
    %cst_15 = arith.constant dense<0.000000e+00> : vector<1xf32>
    %30 = vector.multi_reduction <add>, %29, %cst_15 [1, 2] : vector<1x8x16xf32> to vector<1xf32>
    %31 = vector.shape_cast %30 : vector<1xf32> to vector<1x1x1xf32>
    %32 = vector.extract %31[0, 0, 0] : f32 from vector<1x1x1xf32>
    %cst_16 = arith.constant 0.000000e+00 : f32
    %33 = arith.subf %cst_16, %32 : f32
    %cst_17 = arith.constant 1.250000e-01 : f32
    %34 = arith.mulf %33, %cst_17 : f32
    %35 = vector.broadcast %34 : f32 to vector<1x1xf32>
    %c0_18 = arith.constant 0 : index
    %c0_19 = arith.constant 0 : index
    %36 = vector.load %arg5[%c0_18, %c0_19] : memref<1x1xf32, #tpu.memory_space<vmem>>, vector<1x1xf32>
    tpu.vector_store %arg5[%c0_18, %c0_19], %35 {strides = array<i32>} : memref<1x1xf32, #tpu.memory_space<vmem>>, vector<1x1xf32>,
    return
  }
  func.func @transform_0(%arg0: i32) -> (i32, i32, i32) {
    %c0_i32 = arith.constant 0 : i32
    %c0_i32_0 = arith.constant 0 : i32
    %c0_i32_1 = arith.constant 0 : i32
    %c0_i32_2 = arith.constant 0 : i32
    return %c0_i32, %c0_i32_0, %c0_i32_1 : i32, i32, i32
  }
  func.func @transform_1(%arg0: i32) -> (i32, i32) {
    %c0_i32 = arith.constant 0 : i32
    %c0_i32_0 = arith.constant 0 : i32
    %c0_i32_1 = arith.constant 0 : i32
    return %c0_i32, %c0_i32_0 : i32, i32
  }
  func.func @transform_2(%arg0: i32) -> (i32, i32) {
    %c0_i32 = arith.constant 0 : i32
    %c0_i32_0 = arith.constant 0 : i32
    %c0_i32_1 = arith.constant 0 : i32
    return %c0_i32, %c0_i32_0 : i32, i32
  }
  func.func @transform_3(%arg0: i32) -> (i32, i32) {
    %c0_i32 = arith.constant 0 : i32
    %c0_i32_0 = arith.constant 0 : i32
    %c0_i32_1 = arith.constant 0 : i32
    return %c0_i32, %c0_i32_0 : i32, i32
  }
  func.func @transform_4(%arg0: i32) -> (i32, i32) {
    %c0_i32 = arith.constant 0 : i32
    %c0_i32_0 = arith.constant 0 : i32
    %c0_i32_1 = arith.constant 0 : i32
    return %c0_i32, %c0_i32_0 : i32, i32
  }
}

</mosaic_0001>

<llo_original>
// kernel: _hm_forward.2
$region0: #{_hm_forward.2}
  #allocation0 [shape = 'u32[]', space=smem, size = 0x4, offset = 0x4, fixed_abs, tag = 'smem constant byte address 0x4 - core index']
  #allocation1 [shape = 'u32[144,128]{1,0:T(1,128)}', space=vmem, size = 0x12000, scoped, tag = 'internal scratch']
  %s0 = inlined_call_operand.vmem [shape: s32[2,128], index: 0, kind: input, shape index: {}]
  %s1 = inlined_call_operand.vmem [shape: bf16[256,32], index: 1, kind: input, shape index: {}]
  %s2 = inlined_call_operand.vmem [shape: f32[2,16,32], index: 2, kind: output, shape index: {}]
  %s3 = sld [smem:[#allocation0]]
  $region45: #{_hm_forward.2} parent=0
    _
  %s5 = ssub.s32 1, %s3
  %s6 = scalar_select 0, %s5, %s3
  loop: start=0, step=1, limit=4
  $region2: #{_hm_forward.2} parent=0 // loop_pre_header
    _
  $region3: #{_hm_forward.2} parent=0 // loop_header
    %s8 = sphi 0, %s12
    %p9 = scmp.ge.s32.totalorder %s8, 4
    %s15 = sphi 0, %s27
    %s16 = sphi 0, %s23
    %s17 = sphi 0, %s15
    %s18 = sphi 0, %s16
    %s19 = sphi 0, %s17
    %s20 = sphi 0, %s18
    %s28 = sphi 0, %s28
    %s30 = sphi 0, %s28
    %s31 = sphi 0, %s30
    %s45 = sphi 0, %s31
    %s53 = sphi 0, %s55
    %s56 = sphi 0, %s53
    %s57 = sphi 0, %s56
    %s73 = sphi 0, %s57
    %s79 = sphi 0, %s81
    %s82 = sphi 0, %s79
    %s83 = sphi 0, %s82
    %s99 = sphi 0, %s83
  $region4: #{_hm_forward.2} parent=0 // loop_header_branch
    %11 = sbr.rel (%p9) target = $region8
  $region5: #{_hm_forward.2} parent=0 // loop_body
    %s13 = ssub.s32 %s8, 1
    %s14 = ssub.s32 %s8, 2
    %s21 = sadd.s32 1, %s16
    %p22 = scmp.ge.s32.totalorder %s21, 1
    %s23 = scalar_select %p22, 0, %s21
    %s24 = sadd.s32 1, %s15
    %s25 = scalar_select %p22, %s24, %s15
    %p26 = scmp.ge.s32.totalorder %s25, 2
    %s27 = scalar_select %p26, 0, %s25
    %s29 = sadd.s32 %s28, 1
    %p32 = scmp.eq.s32.totalorder %s8, 1
    %p33 = scmp.ne.s32.totalorder %s28, %s30
    %p34 = scmp.eq.s32.totalorder %s8, 0
    %p35 = por %p33, %p34
    %p36 = scmp.ne.s32.totalorder %s28, %s30
    %p37 = scmp.eq.s32.totalorder %s13, 1
    %p38 = por %p36, %p37
    %p39 = scmp.ne.s32.totalorder %s30, %s31
    %p40 = scmp.eq.s32.totalorder %s13, 0
    %p41 = por %p39, %p40
    %p42 = scmp.ne.s32.totalorder %s30, %s31
    %p43 = scmp.eq.s32.totalorder %s14, 1
    %p44 = por %p42, %p43
    %p46 = scmp.ne.s32.totalorder %s31, %s45
    %p47 = scmp.eq.s32.totalorder %s14, 0
    %p48 = por %p46, %p47
    %s49 = sadd.s32 %s15, %s16
    %s50 = sadd.s32 %s27, %s23
    %s51 = ssub.s32 %s49, %s50
    %p52 = scmp.eq.s32.totalorder %s51, 0
    %s54 = sadd.s32 %s53, 1
    %s55 = scalar_select %p52, %s53, %s54
    %p58 = pneg %p52
    %p59 = scmp.eq.s32.totalorder %s8, 1
    %p60 = por %p58, %p59
    %p61 = scmp.ne.s32.totalorder %s53, %s56
    %p62 = scmp.eq.s32.totalorder %s8, 0
    %p63 = por %p61, %p62
    %p64 = scmp.ne.s32.totalorder %s53, %s56
    %p65 = scmp.eq.s32.totalorder %s13, 1
    %p66 = por %p64, %p65
    %p67 = scmp.ne.s32.totalorder %s56, %s57
    %p68 = scmp.eq.s32.totalorder %s13, 0
    %p69 = por %p67, %p68
    %p70 = scmp.ne.s32.totalorder %s56, %s57
    %p71 = scmp.eq.s32.totalorder %s14, 1
    %p72 = por %p70, %p71
    %p74 = scmp.ne.s32.totalorder %s57, %s73
    %p75 = scmp.eq.s32.totalorder %s14, 0
    %p76 = por %p74, %p75
    %s77 = ssub.s32 %s15, %s27
    %p78 = scmp.eq.s32.totalorder %s77, 0
    %s80 = sadd.s32 %s79, 1
    %s81 = scalar_select %p78, %s79, %s80
    %p84 = pneg %p78
    %p85 = scmp.eq.s32.totalorder %s8, 1
    %p86 = por %p84, %p85
    %p87 = scmp.ne.s32.totalorder %s79, %s82
    %p88 = scmp.eq.s32.totalorder %s8, 0
    %p89 = por %p87, %p88
    %p90 = scmp.ne.s32.totalorder %s79, %s82
    %p91 = scmp.eq.s32.totalorder %s13, 1
    %p92 = por %p90, %p91
    %p93 = scmp.ne.s32.totalorder %s82, %s83
    %p94 = scmp.eq.s32.totalorder %s13, 0
    %p95 = por %p93, %p94
    %p96 = scmp.ne.s32.totalorder %s82, %s83
    %p97 = scmp.eq.s32.totalorder %s14, 1
    %p98 = por %p96, %p97
    %p100 = scmp.ne.s32.totalorder %s83, %s99
    %p101 = scmp.eq.s32.totalorder %s14, 0
    %p102 = por %p100, %p101
    %p103 = scmp.le.s32.totalorder 1, %s8
    %p104 = scmp.lt.s32.totalorder %s8, 3
    %p105 = pnand %p103, %p104
    %p106 = pneg %p105
    // Predicated region
    $region9: #{_hm_forward.2} parent=5 // pred_check
      _
    $region10: #{_hm_forward.2} parent=5 // pred_check_branch
      %108 = sbr.rel (%p105) target = $region12
    $region11: #{_hm_forward.2} parent=5 // pred_region
      %s109 = ssub.s32 %s8, 1
      // Predicated region
      $region13: #{_hm_forward.2} parent=11 // pred_check
        %p110 = pneg %p41
      $region14: #{_hm_forward.2} parent=11 // pred_check_branch
        %112 = sbr.rel (%p110) target = $region16
      $region15: #{_hm_forward.2} parent=11 // pred_region
        _
      $region16: #{_hm_forward.2} parent=11 // pred_fallthru
        _
    $region12: #{_hm_forward.2} parent=5 // pred_fallthru
      _
    %p113 = scmp.lt.s32.totalorder %s8, 2
    // Predicated region
    $region17: #{_hm_forward.2} parent=5 // pred_check
      %p114 = pneg %p113
    $region18: #{_hm_forward.2} parent=5 // pred_check_branch
      %116 = sbr.rel (%p114) target = $region20
    $region19: #{_hm_forward.2} parent=5 // pred_region
      // Predicated region
      $region21: #{_hm_forward.2} parent=19 // pred_check
        %p117 = pneg %p63
      $region22: #{_hm_forward.2} parent=19 // pred_check_branch
        %119 = sbr.rel (%p117) target = $region24
      $region23: #{_hm_forward.2} parent=19 // pred_region
        %s120 = sadd.s32 %s15, %s16
        %s121 = smul.u32 16, %s120
        %p122 = scmp.lt.s32.totalorder %s121, 31
        %s123 = scalar_select %p122, %s121, 31
        %s124 = smul.addr %s123, 4
        %s125 = scalar_lea.vmem %s1, %s124
        %s126 = sadd.s32 %s15, %s16
        %s127 = smul.u32 16, %s126
      $region24: #{_hm_forward.2} parent=19 // pred_fallthru
        _
    $region20: #{_hm_forward.2} parent=5 // pred_fallthru
      _
    %p128 = scmp.le.s32.totalorder 1, %s8
    %p129 = scmp.lt.s32.totalorder %s8, 3
    %p130 = pnand %p128, %p129
    %p131 = pneg %p130
    // Predicated region
    $region25: #{_hm_forward.2} parent=5 // pred_check
      _
    $region26: #{_hm_forward.2} parent=5 // pred_check_branch
      %133 = sbr.rel (%p130) target = $region28
    $region27: #{_hm_forward.2} parent=5 // pred_region
      %s134 = ssub.s32 %s8, 1
      %p135 = pneg %p41
      %p136 = pneg %p38
      %s137 = sadd.s32 %s17, %s18
      %s138 = smul.u32 16, %s137
      %p139 = scmp.lt.s32.totalorder %s138, 31
      %s140 = scalar_select %p139, %s138, 31
      %s141 = smul.addr %s140, 4
      %s142 = scalar_lea.vmem %s1, %s141
      %p143 = pneg %p69
      %p144 = pneg %p66
      %p145 = pneg %p95
      %p146 = pneg %p92
      %p147 = scmp.lt.s32.totalorder %s17, 1
      %s148 = scalar_select %p147, %s17, 1
      %s149 = smul.addr %s148, 2
      %s150 = smul.addr %s149, 8
      %s151 = scalar_lea.vmem %s2, %s150
      %s152 = sadd.s32 %s17, %s18
      %s153 = smul.u32 16, %s152
      %p154 = scmp.lt.s32.totalorder %s153, 31
      %s155 = scalar_select %p154, %s153, 31
      %s156 = smul.addr %s155, 4
      %s157 = scalar_lea.vmem %s1, %s156
      %s158 = sadd.s32 %s17, %s18
      %s159 = smul.u32 16, %s158
      %p160 = scmp.lt.s32.totalorder %s17, 1
      %s161 = scalar_select %p160, %s17, 1
      %s162 = smul.addr %s161, 2
      %s163 = smul.addr %s162, 8
      %s164 = scalar_lea.vmem %s2, %s163
      %p166 = scmp.eq.s32.totalorder %s18, 0
      // Predicated region
      $region29: #{_hm_forward.2} parent=27 // pred_check
        %p167 = pneg %p166
      $region30: #{_hm_forward.2} parent=27 // pred_check_branch
        %169 = sbr.rel (%p167) target = $region32
      $region31: #{_hm_forward.2} parent=27 // pred_region
        %vm170 = vcmask 261120
        %171 = vst.msk [vmem:[%s164] sm:$0xff] %vm170, 0.0
        %172 = vst.msk [vmem:[%s164 + $0x8] sm:$0xff] %vm170, 0.0
      $region32: #{_hm_forward.2} parent=27 // pred_fallthru
        _
      %s173 = sadd.s32 %s17, %s18
      %s174 = scalar_lea.vmem %s0, %s173
      %v175 = vld [vmem:[%s174] sm:$0x1]
      %v176 = vlaneseq
      %v177 = vshrl.u32 %v176, 7
      %v178 = vadd.s32 %v177, 8
      %v179 = vlaneseq
      %v180 = vshrl.u32 %v179, 7
      %v181 = vsub.s32 0, %v180
      %v182 = vrot.slane %v175, %v181
      %vm183 = vcmp.eq.s32.totalorder %v177, %v182
      %vm184 = vcmp.eq.s32.totalorder %v178, %v182
      %v185 = vsel %vm183, 1, 0
      %v186 = vsel %vm184, 1, 0
      %v187 = vcvt.s32.f32 %v185
      %v188 = vcvt.s32.f32 %v186
      %v189 = vpack.c.bf16 %v188, %v187
      %v190 = vld [vmem:[%s164] sm:$0xff]
      %v191 = vld [vmem:[%s164 + $0x8] sm:$0xff]
      %v192 = vld [vmem:[%s157] sm:$0xf]
      %v193 = vld [vmem:[%s157 + $0x4] sm:$0xf]
      %v194 = vld [vmem:[%s157 + $0x8] sm:$0xf]
      %v195 = vld [vmem:[%s157 + $0xc] sm:$0xf]
      %v196 = vld [vmem:[%s157 + $0x10] sm:$0xf]
      %v197 = vld [vmem:[%s157 + $0x14] sm:$0xf]
      %v198 = vld [vmem:[%s157 + $0x18] sm:$0xf]
      %v199 = vld [vmem:[%s157 + $0x1c] sm:$0xf]
      %v200 = vld [vmem:[%s157 + $0x20] sm:$0xf]
      %v201 = vld [vmem:[%s157 + $0x24] sm:$0xf]
      %v202 = vld [vmem:[%s157 + $0x28] sm:$0xf]
      %v203 = vld [vmem:[%s157 + $0x2c] sm:$0xf]
      %v204 = vld [vmem:[%s157 + $0x30] sm:$0xf]
      %v205 = vld [vmem:[%s157 + $0x34] sm:$0xf]
      %v206 = vld [vmem:[%s157 + $0x38] sm:$0xf]
      %v207 = vld [vmem:[%s157 + $0x3c] sm:$0xf]
      %v224 = vunpack.c.l.b16 %v192
      %v225 = vunpack.c.l.b16 %v193
      %v226 = vunpack.c.l.b16 %v194
      %v227 = vunpack.c.l.b16 %v195
      %v228 = vunpack.c.l.b16 %v196
      %v229 = vunpack.c.l.b16 %v197
      %v230 = vunpack.c.l.b16 %v198
      %v231 = vunpack.c.l.b16 %v199
      %v232 = vunpack.c.l.b16 %v200
      %v233 = vunpack.c.l.b16 %v201
      %v234 = vunpack.c.l.b16 %v202
      %v235 = vunpack.c.l.b16 %v203
      %v236 = vunpack.c.l.b16 %v204
      %v237 = vunpack.c.l.b16 %v205
      %v238 = vunpack.c.l.b16 %v206
      %v239 = vunpack.c.l.b16 %v207
      %v240 = vpack.c.b16 %v225, %v224
      %v241 = vpack.c.b16 %v227, %v226
      %v242 = vpack.c.b16 %v229, %v228
      %v243 = vpack.c.b16 %v231, %v230
      %v244 = vpack.c.b16 %v233, %v232
      %v245 = vpack.c.b16 %v235, %v234
      %v246 = vpack.c.b16 %v237, %v236
      %v247 = vpack.c.b16 %v239, %v238
      %256 = vmatprep.subr.bf16.mxu0 0
      %257 = vmatpush1.bf16.msra.mxu0 %v240
      %258 = vmatprep.subr.bf16.mxu0 0
      %259 = vmatpush1.bf16.msra.mxu0 %v241
      %260 = vmatprep.subr.bf16.mxu0 0
      %261 = vmatpush1.bf16.msra.mxu0 %v242
      %262 = vmatprep.subr.bf16.mxu0 0
      %263 = vmatpush1.bf16.msra.mxu0 %v243
      %264 = vmatprep.subr.bf16.mxu0 0
      %265 = vmatpush1.bf16.msra.mxu0 %v244
      %266 = vmatprep.subr.bf16.mxu0 0
      %267 = vmatpush1.bf16.msra.mxu0 %v245
      %268 = vmatprep.subr.bf16.mxu0 0
      %269 = vmatpush1.bf16.msra.mxu0 %v246
      %270 = vmatprep.subr.bf16.mxu0 0
      %271 = vmatpush1.bf16.msra.mxu0 %v247
      %272 = vmatprep.subr.bf16.mxu0 0
      %273 = vmatpush1.bf16.msra.mxu0 0
      %274 = vmatprep.subr.bf16.mxu0 0
      %275 = vmatpush1.bf16.msra.mxu0 0
      %276 = vmatprep.subr.bf16.mxu0 0
      %277 = vmatpush1.bf16.msra.mxu0 0
      %278 = vmatprep.subr.bf16.mxu0 0
      %279 = vmatpush1.bf16.msra.mxu0 0
      %280 = vmatprep.subr.bf16.mxu0 0
      %281 = vmatpush1.bf16.msra.mxu0 0
      %282 = vmatprep.subr.bf16.mxu0 0
      %283 = vmatpush1.bf16.msra.mxu0 0
      %284 = vmatprep.subr.bf16.mxu0 0
      %285 = vmatpush1.bf16.msra.mxu0 0
      %286 = vmatprep.subr.bf16.mxu0 0
      %287 = vmatpush1.bf16.msra.mxu0 0
      %288 = vmatprep.mubr.bf16.mxu0 0
      %289 = vmatmul.mubr.bf16.gmra.mrb[0].mxu0 %v189
      %v290 = vpop.f32.mrb[0].mxu0
      %v291 = vadd.f32 0.0, %v290
      %v292 = vpop.f32.mrb[0].mxu0
      %v293 = vpop.f32.mrb[0].mxu0
      %v294 = vadd.f32 0.0, %v293
      %v295 = vpop.f32.mrb[0].mxu0
      %296 = vdwg.mxu0
      %v297 = vadd.f32 %v190, %v291
      %v298 = vadd.f32 %v191, %v294
      %vm299 = vcmask 261120
      %300 = vst.msk [vmem:[%s164] sm:$0xff] %vm299, %v297
      %301 = vst.msk [vmem:[%s164 + $0x8] sm:$0xff] %vm299, %v298
      %p302 = scmp.lt.s32.totalorder %s17, 1
      %s303 = scalar_select %p302, %s17, 1
      %s304 = smul.addr %s303, 2
      %s305 = smul.addr %s304, 8
      %s306 = scalar_lea.vmem %s2, %s305
      // Predicated region
      $region33: #{_hm_forward.2} parent=27 // pred_check
        %p307 = pneg %p92
      $region34: #{_hm_forward.2} parent=27 // pred_check_branch
        %309 = sbr.rel (%p307) target = $region36
      $region35: #{_hm_forward.2} parent=27 // pred_region
        _
      $region36: #{_hm_forward.2} parent=27 // pred_fallthru
        _
    $region28: #{_hm_forward.2} parent=5 // pred_fallthru
      _
    %p310 = scmp.le.s32.totalorder 2, %s8
    // Predicated region
    $region37: #{_hm_forward.2} parent=5 // pred_check
      %p311 = pneg %p310
    $region38: #{_hm_forward.2} parent=5 // pred_check_branch
      %313 = sbr.rel (%p311) target = $region40
    $region39: #{_hm_forward.2} parent=5 // pred_region
      %s314 = ssub.s32 %s8, 2
      // Predicated region
      $region41: #{_hm_forward.2} parent=39 // pred_check
        %p315 = pneg %p98
      $region42: #{_hm_forward.2} parent=39 // pred_check_branch
        %317 = sbr.rel (%p315) target = $region44
      $region43: #{_hm_forward.2} parent=39 // pred_region
        %p318 = scmp.lt.s32.totalorder %s19, 1
        %s319 = scalar_select %p318, %s19, 1
        %s320 = smul.addr %s319, 2
        %s321 = smul.addr %s320, 8
        %s322 = scalar_lea.vmem %s2, %s321
      $region44: #{_hm_forward.2} parent=39 // pred_fallthru
        _
    $region40: #{_hm_forward.2} parent=5 // pred_fallthru
      _
  $region6: #{_hm_forward.2} parent=0 // loop_footer
    %s12 = sadd.s32 1, %s8
  $region7: #{_hm_forward.2} parent=0 // loop_footer_branch
    %7 = sbr.rel target = $region3
  $region8: #{_hm_forward.2} parent=0 // loop_exit
    _

// kernel: _hm_forward.3
$region0: #{_hm_forward.3}
  #allocation0 [shape = 'u32[]', space=smem, size = 0x4, offset = 0x4, fixed_abs, tag = 'smem constant byte address 0x4 - core index']
  #allocation1 [shape = 'u32[144,128]{1,0:T(1,128)}', space=vmem, size = 0x12000, scoped, tag = 'internal scratch']
  %s0 = inlined_call_operand.vmem [shape: f32[2,16,32], index: 0, kind: input, shape index: {}]
  %s1 = inlined_call_operand.vmem [shape: f32[1,16], index: 1, kind: input, shape index: {}]
  %s2 = inlined_call_operand.vmem [shape: f32[8,32], index: 2, kind: input, shape index: {}]
  %s3 = inlined_call_operand.vmem [shape: f32[8,16], index: 3, kind: input, shape index: {}]
  %s4 = inlined_call_operand.hbm [shape: f32[1,1], index: 4, kind: output, shape index: {}]
  %s5 = sld [smem:[#allocation0]]
  $region26: #{_hm_forward.3} parent=0
    _
  %s7 = ssub.s32 1, %s5
  %s8 = scalar_select 0, %s7, %s5
  $region1: #{_hm_forward.3} parent=0
    #allocation2 [shape = 'u8[512]{0}', space=vmem, size = 0x400, scoped, tag = 'output window, operand 0, single buffered']
    #allocation3 [shape = 's32[1]{0}', space=sflag, size = 0x4, scoped, tag = 'scoped memory for _hm_forward.3']
    %9 = vsyncpa [#allocation3], 0
    // Predicated region
    $region2: #{_hm_forward.3} parent=1 // pred_check
      _
    $region3: #{_hm_forward.3} parent=1 // pred_check_branch
      %11 = sbr.rel (0) target = $region5
    $region4: #{_hm_forward.3} parent=1 // pred_region
      _
    $region5: #{_hm_forward.3} parent=1 // pred_fallthru
      _
    // Predicated region
    $region6: #{_hm_forward.3} parent=1 // pred_check
      _
    $region7: #{_hm_forward.3} parent=1 // pred_check_branch
      %13 = sbr.rel (0) target = $region9
    $region8: #{_hm_forward.3} parent=1 // pred_region
      _
    $region9: #{_hm_forward.3} parent=1 // pred_fallthru
      _
    // Predicated region
    $region10: #{_hm_forward.3} parent=1 // pred_check
      _
    $region11: #{_hm_forward.3} parent=1 // pred_check_branch
      %15 = sbr.rel (0) target = $region13
    $region12: #{_hm_forward.3} parent=1 // pred_region
      _
    $region13: #{_hm_forward.3} parent=1 // pred_fallthru
      _
    // Predicated region
    $region14: #{_hm_forward.3} parent=1 // pred_check
      _
    $region15: #{_hm_forward.3} parent=1 // pred_check_branch
      %17 = sbr.rel (0) target = $region17
    $region16: #{_hm_forward.3} parent=1 // pred_region
      _
    $region17: #{_hm_forward.3} parent=1 // pred_fallthru
      _
    %v18 = vld [vmem:[%s0] sm:$0xff]
    %v19 = vld [vmem:[%s0 + $0x8] sm:$0xff]
    %v20 = vld [vmem:[%s0 + $0x10] sm:$0xff]
    %v21 = vld [vmem:[%s0 + $0x18] sm:$0xff]
    %vm22 = vcmask 261120
    %v23 = vsel %vm22, %v18, 0.0
    %v24 = vsel %vm22, %v20, 0.0
    %v25 = vadd.f32 %v23, %v24
    %v26 = vsel %vm22, %v19, 0.0
    %v27 = vsel %vm22, %v21, 0.0
    %v28 = vadd.f32 %v26, %v27
    %v29 = vld [vmem:[%s1] sm:$0x1]
    %vm30 = vcmp.gt.f32.partialorder %v29, 0.0
    %v31 = vsel %vm30, 1, 0
    %v32 = vcvt.s32.f32 %v31
    %v33 = vsel %vm30, %v29, 1.0
    %v34 = vld [vmem:[%s2] sm:$0xff]
    %v36 = vsel %vm22, %v34, 0
    %v39 = vsel %vm22, %v25, 0
    %v42 = vsel %vm22, %v28, 0
    %44 = vmatprep.subr.mxu0 0.0
    %45 = vmatpush1.xpose.msra.mxu0 %v39
    %46 = vmatprep.subr.mxu0 0.0
    %47 = vmatpush1.xpose.msra.mxu0 %v42
    %48 = vmatprep.subr.mxu0 0.0
    %49 = vmatpush1.xpose.msra.mxu0 0.0
    %50 = vmatprep.subr.mxu0 0.0
    %51 = vmatpush1.xpose.msra.mxu0 0.0
    %52 = vmatprep.subr.mxu0 0.0
    %53 = vmatpush1.xpose.msra.mxu0 0.0
    %54 = vmatprep.subr.mxu0 0.0
    %55 = vmatpush1.xpose.msra.mxu0 0.0
    %56 = vmatprep.subr.mxu0 0.0
    %57 = vmatpush1.xpose.msra.mxu0 0.0
    %58 = vmatprep.subr.mxu0 0.0
    %59 = vmatpush1.xpose.msra.mxu0 0.0
    %60 = vmatprep.subr.mxu0 0.0
    %61 = vmatpush1.xpose.msra.mxu0 0.0
    %62 = vmatprep.subr.mxu0 0.0
    %63 = vmatpush1.xpose.msra.mxu0 0.0
    %64 = vmatprep.subr.mxu0 0.0
    %65 = vmatpush1.xpose.msra.mxu0 0.0
    %66 = vmatprep.subr.mxu0 0.0
    %67 = vmatpush1.xpose.msra.mxu0 0.0
    %68 = vmatprep.subr.mxu0 0.0
    %69 = vmatpush1.xpose.msra.mxu0 0.0
    %70 = vmatprep.subr.mxu0 0.0
    %71 = vmatpush1.xpose.msra.mxu0 0.0
    %72 = vmatprep.subr.mxu0 0.0
    %73 = vmatpush1.xpose.msra.mxu0 0.0
    %74 = vmatprep.subr.mxu0 0.0
    %75 = vmatpush1.xpose.msra.mxu0 0.0
    %76 = vmatprep.subr.mxu0 0.0
    %77 = vmatpush1.xpose.msra.mxu0 0.0
    %78 = vmatprep.subr.mxu0 0.0
    %79 = vmatpush1.xpose.msra.mxu0 0.0
    %80 = vmatprep.subr.mxu0 0.0
    %81 = vmatpush1.xpose.msra.mxu0 0.0
    %82 = vmatprep.subr.mxu0 0.0
    %83 = vmatpush1.xpose.msra.mxu0 0.0
    %84 = vmatprep.subr.mxu0 0.0
    %85 = vmatpush1.xpose.msra.mxu0 0.0
    %86 = vmatprep.subr.mxu0 0.0
    %87 = vmatpush1.xpose.msra.mxu0 0.0
    %88 = vmatprep.subr.mxu0 0.0
    %89 = vmatpush1.xpose.msra.mxu0 0.0
    %90 = vmatprep.subr.mxu0 0.0
    %91 = vmatpush1.xpose.msra.mxu0 0.0
    %92 = vmatprep.subr.mxu0 0.0
    %93 = vmatpush1.xpose.msra.mxu0 0.0
    %94 = vmatprep.subr.mxu0 0.0
    %95 = vmatpush1.xpose.msra.mxu0 0.0
    %96 = vmatprep.subr.mxu0 0.0
    %97 = vmatpush1.xpose.msra.mxu0 0.0
    %98 = vmatprep.subr.mxu0 0.0
    %99 = vmatpush1.xpose.msra.mxu0 0.0
    %100 = vmatprep.subr.mxu0 0.0
    %101 = vmatpush1.xpose.msra.mxu0 0.0
    %102 = vmatprep.subr.mxu0 0.0
    %103 = vmatpush1.xpose.msra.mxu0 0.0
    %104 = vmatprep.subr.mxu0 0.0
    %105 = vmatpush1.xpose.msra.mxu0 0.0
    %106 = vmatprep.subr.mxu0 0.0
    %107 = vmatpush1.xpose.msra.mxu0 0.0
    %108 = vmatprep.mubr.f32.mxu0 0.0
    %109 = vmatmul.mubr.f32.gmra.mrb[0].mxu0 %v36
    %v110 = vpop.f32.mrb[0].mxu0
    %v111 = vadd.f32 0.0, %v110
    %v112 = vpop.f32.mrb[0].mxu0
    %113 = vdwg.mxu0
    %v114 = vmul.f32 %v111, 20.0
    %v116 = vlaneseq
    %v117 = vshrl.u32 %v116, 7
    %v118 = vsub.s32 0, %v117
    %v119 = vrot.slane %v33, %v118
    %v121 = vrcp.pop %v119
    %v122 = vmul.f32 %v114, %v121
    %v123 = vmul.f32 %v122, 1.442695
    %v124 = vpow.pop %v123
    %v126 = vlaneseq
    %v127 = vshrl.u32 %v126, 7
    %v128 = vsub.s32 0, %v127
    %v129 = vrot.slane %v32, %v128
    %v131 = vmul.f32 %v124, %v129
    %vm132 = vcmask 130048
    %v133 = vsel %vm132, %v131, 0.0
    %134 = vadd.xlane.f32.xlu0 %v133
    %v135 = vpop.xlane.xlu0 %134
    %v136 = vadd.f32 %v135, 1e-06
    %v137 = vrcp.pop %v136
    %v138 = vmul.f32 %v131, %v137
    %v139 = vadd.f32 %v138, 1e-06
    %v140 = vlog2.pop %v139
    %v141 = vmul.f32 %v140, 0.6931472
    %v142 = vld [vmem:[%s3] sm:$0xff]
    %v143 = vmul.f32 %v142, %v141
    %v144 = vsel %vm132, %v143, 0.0
    %145 = vadd.xlane.f32.xlu0 %v144
    %v146 = vpop.xlane.xlu0 %145
    %v147 = vrot.slane %v146, 4
    %v148 = vadd.f32 %v146, %v147
    %v149 = vrot.slane %v148, 2
    %v150 = vadd.f32 %v148, %v149
    %v151 = vrot.slane %v150, 1
    %v152 = vadd.f32 %v150, %v151
    %s153 = vtos %v152
    %s154 = ssub.f32 0.0, %s153
    %s155 = smul.f32 %s154, 0.125
    %v156 = vstv %s155
    %vm157 = vcmask 0
    %158 = vst.msk [vmem:[#allocation2] sm:$0x1] %vm157, %v156
    // Predicated region
    $region18: #{_hm_forward.3} parent=1 // pred_check
      _
    $region19: #{_hm_forward.3} parent=1 // pred_check_branch
      %160 = sbr.rel (0) target = $region21
    $region20: #{_hm_forward.3} parent=1 // pred_region
      %s162 = ssub.s32 16, 16
      %163 = vsyncadd [#allocation3], %s162
      %s165 = sshll.u32 [#allocation2], 4
      %s166 = int_to_ptr.vmem [resolvable:$true] %s165
      %168 = dma.vmem_to_hbm [thread:$0]  %s166, 16, %s4, [#allocation3]
    $region21: #{_hm_forward.3} parent=1 // pred_fallthru
      _
    // Predicated region
    $region22: #{_hm_forward.3} parent=1 // pred_check
      _
    $region23: #{_hm_forward.3} parent=1 // pred_check_branch
      %170 = sbr.rel (0) target = $region25
    $region24: #{_hm_forward.3} parent=1 // pred_region
      %171 = dma.done [#allocation3], 16
    $region25: #{_hm_forward.3} parent=1 // pred_fallthru
      _
    %172 = vsyncpa [#allocation3], 1

</llo_original>
